<compile_context>
chip_gen: v6e
topology: v6e:2x2x1
jax: 0.10.0
libtpu: 0.0.40
codegen_flags: <defaults>
</compile_context>

<pallas_src>
import jax
import jax.numpy as jnp
from jax.experimental import pallas as pl
from jax.experimental.pallas import tpu as pltpu


def _round_up(x, m):
    return (x + m - 1) // m * m


def phi3_mlp_kernel(x_ref, wgu_ref, wd_ref, o_ref, acc_ref):
    # x_ref  : [tm, d_model]        token tile (resident across the inner axis)
    # wgu_ref: [d_model, 2*tn]      fused gate|up weight tile (gate cols first)
    # wd_ref : [tn, d_model]        down-proj weight tile
    # o_ref  : [tm, d_model]        output tile (written on the last inner step)
    # acc_ref: [tm, d_model] f32    accumulator scratch
    k = pl.program_id(1)

    @pl.when(k == 0)
    def _():
        acc_ref[...] = jnp.zeros_like(acc_ref)

    tn = wd_ref.shape[0]

    # One fused matmul for gate and up projections of this d_inner chunk.
    gu = jnp.dot(x_ref[...], wgu_ref[...], preferred_element_type=jnp.float32)
    gate = gu[:, :tn]
    up = gu[:, tn:]

    # SiLU(gate) = gate * sigmoid(gate); VPU/EUP elementwise.
    h = up * (gate * jax.nn.sigmoid(gate))

    acc_ref[...] += jnp.dot(
        h.astype(wd_ref.dtype), wd_ref[...], preferred_element_type=jnp.float32
    )

    @pl.when(k == pl.num_programs(1) - 1)
    def _():
        o_ref[...] = acc_ref[...].astype(o_ref.dtype)


def prepare_phi3_weights(w_gate_up, w_down, *, tn=512):
    """One-time weight preparation (do this at model-load time, not per call).

    w_gate_up: [2*d_inner, d_model]  (PyTorch nn.Linear weight layout)
    w_down:    [d_model, d_inner]    (PyTorch nn.Linear weight layout)

    Returns (wgu_t, wd_t, tn_eff):
      wgu_t: [d_model, 2*d_inner_p] — gate/up transposed and interleaved at
             tn_eff-column granularity so tile k holds [gate_k | up_k].
      wd_t : [d_inner_p, d_model]   — down-proj transposed (rows padded).
    """
    two_d_inner, d_model = w_gate_up.shape
    d_inner = two_d_inner // 2

    tn_eff = min(tn, _round_up(d_inner, 128))
    d_inner_p = _round_up(d_inner, tn_eff)

    wg_t = w_gate_up[:d_inner, :].T  # [d_model, d_inner]
    wu_t = w_gate_up[d_inner:, :].T  # [d_model, d_inner]
    wd_t = w_down.T                  # [d_inner, d_model]

    if d_inner_p != d_inner:
        pad = d_inner_p - d_inner
        wg_t = jnp.pad(wg_t, ((0, 0), (0, pad)))
        wu_t = jnp.pad(wu_t, ((0, 0), (0, pad)))
        wd_t = jnp.pad(wd_t, ((0, pad), (0, 0)))

    kt = d_inner_p // tn_eff
    # Interleave gate/up per tn_eff-wide chunk: tile k = [gate_k | up_k].
    wgu_t = jnp.stack(
        [wg_t.reshape(d_model, kt, tn_eff), wu_t.reshape(d_model, kt, tn_eff)],
        axis=2,
    ).reshape(d_model, kt * 2 * tn_eff)
    return wgu_t, wd_t, tn_eff


def phi3_mlp(hidden_states, wgu_t, wd_t, tn, *, tm=256):
    """hidden_states: [B, S, d_model]
    wgu_t, wd_t, tn: output of prepare_phi3_weights (prepared once).
    """
    B, S, d_model = hidden_states.shape
    d_inner_p = wd_t.shape[0]
    assert d_inner_p % tn == 0
    assert wgu_t.shape == (d_model, 2 * d_inner_p)

    T = B * S
    x2d = hidden_states.reshape(T, d_model)

    # Token tile: large for MXU occupancy, but no larger than (padded) T.
    tm_eff = min(tm, _round_up(T, 8))
    T_p = _round_up(T, tm_eff)
    if T_p != T:
        x2d = jnp.pad(x2d, ((0, T_p - T), (0, 0)))

    grid = (T_p // tm_eff, d_inner_p // tn)

    out2d = pl.pallas_call(
        phi3_mlp_kernel,
        out_shape=jax.ShapeDtypeStruct((T_p, d_model), hidden_states.dtype),
        grid_spec=pltpu.PrefetchScalarGridSpec(
            num_scalar_prefetch=0,
            grid=grid,
            in_specs=[
                # Token tile: resident across the d_inner (reduction) axis.
                pl.BlockSpec((tm_eff, d_model), lambda i, k: (i, 0)),
                # Fused gate|up weight tile for chunk k.
                pl.BlockSpec((d_model, 2 * tn), lambda i, k: (0, k)),
                # Down-proj weight tile for chunk k.
                pl.BlockSpec((tn, d_model), lambda i, k: (k, 0)),
            ],
            out_specs=pl.BlockSpec((tm_eff, d_model), lambda i, k: (i, 0)),
            scratch_shapes=[pltpu.VMEM((tm_eff, d_model), jnp.float32)],
        ),
        compiler_params=pltpu.CompilerParams(
            dimension_semantics=("parallel", "arbitrary"),
            vmem_limit_bytes=64 * 1024 * 1024,
        ),
    )(x2d, wgu_t, wd_t)

    return out2d[:T].reshape(B, S, d_model)


def phi3_mlp_from_torch_layout(hidden_states, w_gate_up, w_down, *, tm=256, tn=512):
    """Convenience wrapper: prep + run (prep should really be amortized)."""
    wgu_t, wd_t, tn_eff = prepare_phi3_weights(w_gate_up, w_down, tn=tn)
    return phi3_mlp(hidden_states, wgu_t, wd_t, tn_eff, tm=tm)


def phi3_mlp_ref(hidden_states, w_gate_up, w_down):
    """Pure-JAX reference matching the PyTorch forward exactly."""
    up_states = jnp.einsum("bsd,od->bso", hidden_states, w_gate_up)
    d_inner = w_gate_up.shape[0] // 2
    gate, up = up_states[..., :d_inner], up_states[..., d_inner:]
    h = up * (gate * jax.nn.sigmoid(gate))
    return jnp.einsum("bsi,di->bsd", h, w_down)


if __name__ == "__main__":
    # Small shapes consistent with the module (lane-aligned for TPU tiling).
    batch, seq = 2, 8
    d_model, d_inner = 128, 256

    key = jax.random.PRNGKey(0)
    kx, kg, kd = jax.random.split(key, 3)

    x = jax.random.normal(kx, (batch, seq, d_model), dtype=jnp.float32)
    # Deterministic synthetic weights in PyTorch nn.Linear layout [out, in].
    w_gate_up = jax.random.normal(kg, (2 * d_inner, d_model), dtype=jnp.float32) * 0.02
    w_down = jax.random.normal(kd, (d_model, d_inner), dtype=jnp.float32) * 0.02

    # f32 correctness check.
    wgu_t, wd_t, tn_eff = prepare_phi3_weights(w_gate_up, w_down, tn=512)
    out = phi3_mlp(x, wgu_t, wd_t, tn_eff, tm=256)
    out = jax.block_until_ready(out)

    ref = phi3_mlp_ref(x, w_gate_up, w_down)
    assert out.shape == (batch, seq, d_model)
    assert jnp.allclose(out, ref, atol=1e-4, rtol=1e-4), "f32 mismatch vs reference"

    # bf16 path (preferred production dtype): loose tolerance vs f32 reference.
    x_bf = x.astype(jnp.bfloat16)
    wgu_bf, wd_bf, tn_bf = prepare_phi3_weights(
        w_gate_up.astype(jnp.bfloat16), w_down.astype(jnp.bfloat16), tn=512
    )
    out_bf = jax.block_until_ready(phi3_mlp(x_bf, wgu_bf, wd_bf, tn_bf, tm=256))
    assert out_bf.shape == (batch, seq, d_model)
    assert jnp.allclose(
        out_bf.astype(jnp.float32), ref, atol=2e-2, rtol=5e-2
    ), "bf16 mismatch vs reference"

    print("KERNEL_OK")
</pallas_src>

<mosaic_0001>
module attributes {stable_mosaic.version = 11 : i64} {
  func.func @phi3_mlp_kernel(%arg0: i32, %arg1: i32, %arg2: memref<16x128xf32, #tpu.memory_space<vmem>>, %arg3: memref<128x512xf32, #tpu.memory_space<vmem>>, %arg4: memref<256x128xf32, #tpu.memory_space<vmem>>, %arg5: memref<16x128xf32, #tpu.memory_space<vmem>>, %arg6: memref<16x128xf32, #tpu.memory_space<vmem>>) attributes {dimension_semantics = [#tpu.dimension_semantics<parallel>, #tpu.dimension_semantics<arbitrary>], iteration_bounds = array<i64: 1, 1>, scalar_prefetch = 0 : i64, scratch_operands = 1 : i64, tpu.core_type = #tpu.core_type<tc>, window_params = [{transform_indices = @transform_0, window_bounds = array<i64: 16, 128>}, {transform_indices = @transform_1, window_bounds = array<i64: 128, 512>}, {transform_indices = @transform_2, window_bounds = array<i64: 256, 128>}, {transform_indices = @transform_3, window_bounds = array<i64: 16, 128>}]} {
    %c0_i32 = arith.constant 0 : i32
    %0 = arith.cmpi eq, %arg1, %c0_i32 : i32
    %1 = arith.extui %0 : i1 to i32
    %c0_i32_0 = arith.constant 0 : i32
    %2 = arith.cmpi ne, %1, %c0_i32_0 : i32
    scf.if %2 {
      %cst_14 = arith.constant 0.000000e+00 : f32
      %23 = vector.broadcast %cst_14 : f32 to vector<16x128xf32>
      %c0_15 = arith.constant 0 : index
      %c0_16 = arith.constant 0 : index
      %24 = vector.load %arg6[%c0_15, %c0_16] : memref<16x128xf32, #tpu.memory_space<vmem>>, vector<16x128xf32>
      tpu.vector_store %arg6[%c0_15, %c0_16], %23 {strides = array<i32>} : memref<16x128xf32, #tpu.memory_space<vmem>>, vector<16x128xf32>,
    } else {
    }
    %c0 = arith.constant 0 : index
    %c0_1 = arith.constant 0 : index
    %3 = vector.load %arg2[%c0, %c0_1] : memref<16x128xf32, #tpu.memory_space<vmem>>, vector<16x128xf32>
    %c0_2 = arith.constant 0 : index
    %c0_3 = arith.constant 0 : index
    %4 = vector.load %arg3[%c0_2, %c0_3] : memref<128x512xf32, #tpu.memory_space<vmem>>, vector<128x512xf32>
    %cst = arith.constant dense<0.000000e+00> : vector<16x512xf32>
    %5 = tpu.matmul %3, %4, %cst {dimension_numbers = #tpu.dot_dimension_numbers<[1], [0], [0], [1], [0, 0, 1, 1], [], []>} : vector<16x128xf32>, vector<128x512xf32>, vector<16x512xf32> -> vector<16x512xf32>
    %6 = vector.extract_strided_slice %5 {offsets = [0, 0], sizes = [16, 256], strides = [1, 1]} : vector<16x512xf32> to vector<16x256xf32>
    %7 = vector.extract_strided_slice %5 {offsets = [0, 256], sizes = [16, 256], strides = [1, 1]} : vector<16x512xf32> to vector<16x256xf32>
    %8 = arith.negf %6 : vector<16x256xf32>
    %9 = math.exp %8 : vector<16x256xf32>
    %cst_4 = arith.constant 1.000000e+00 : f32
    %10 = vector.broadcast %cst_4 : f32 to vector<16x256xf32>
    %11 = arith.addf %10, %9 : vector<16x256xf32>
    %12 = arith.divf %10, %11 : vector<16x256xf32>
    %13 = arith.mulf %6, %12 : vector<16x256xf32>
    %14 = arith.mulf %7, %13 : vector<16x256xf32>
    %c0_5 = arith.constant 0 : index
    %c0_6 = arith.constant 0 : index
    %15 = vector.load %arg6[%c0_5, %c0_6] : memref<16x128xf32, #tpu.memory_space<vmem>>, vector<16x128xf32>
    %c0_7 = arith.constant 0 : index
    %c0_8 = arith.constant 0 : index
    %16 = vector.load %arg4[%c0_7, %c0_8] : memref<256x128xf32, #tpu.memory_space<vmem>>, vector<256x128xf32>
    %cst_9 = arith.constant dense<0.000000e+00> : vector<16x128xf32>
    %17 = tpu.matmul %14, %16, %cst_9 {dimension_numbers = #tpu.dot_dimension_numbers<[1], [0], [0], [1], [0, 0, 1, 1], [], []>} : vector<16x256xf32>, vector<256x128xf32>, vector<16x128xf32> -> vector<16x128xf32>
    %18 = arith.addf %15, %17 : vector<16x128xf32>
    %c0_10 = arith.constant 0 : index
    %c0_11 = arith.constant 0 : index
    %19 = vector.load %arg6[%c0_10, %c0_11] : memref<16x128xf32, #tpu.memory_space<vmem>>, vector<16x128xf32>
    tpu.vector_store %arg6[%c0_10, %c0_11], %18 {strides = array<i32>} : memref<16x128xf32, #tpu.memory_space<vmem>>, vector<16x128xf32>,
    %c0_i32_12 = arith.constant 0 : i32
    %20 = arith.cmpi eq, %arg1, %c0_i32_12 : i32
    %21 = arith.extui %20 : i1 to i32
    %c0_i32_13 = arith.constant 0 : i32
    %22 = arith.cmpi ne, %21, %c0_i32_13 : i32
    scf.if %22 {
      %c0_14 = arith.constant 0 : index
      %c0_15 = arith.constant 0 : index
      %23 = vector.load %arg6[%c0_14, %c0_15] : memref<16x128xf32, #tpu.memory_space<vmem>>, vector<16x128xf32>
      %c0_16 = arith.constant 0 : index
      %c0_17 = arith.constant 0 : index
      %24 = vector.load %arg5[%c0_16, %c0_17] : memref<16x128xf32, #tpu.memory_space<vmem>>, vector<16x128xf32>
      tpu.vector_store %arg5[%c0_16, %c0_17], %23 {strides = array<i32>} : memref<16x128xf32, #tpu.memory_space<vmem>>, vector<16x128xf32>,
    } else {
    }
    return
  }
  func.func @transform_0(%arg0: i32, %arg1: i32) -> (i32, i32) {
    %c0_i32 = arith.constant 0 : i32
    %c0_i32_0 = arith.constant 0 : i32
    return %arg0, %c0_i32 : i32, i32
  }
  func.func @transform_1(%arg0: i32, %arg1: i32) -> (i32, i32) {
    %c0_i32 = arith.constant 0 : i32
    %c0_i32_0 = arith.constant 0 : i32
    return %c0_i32, %arg1 : i32, i32
  }
  func.func @transform_2(%arg0: i32, %arg1: i32) -> (i32, i32) {
    %c0_i32 = arith.constant 0 : i32
    %c0_i32_0 = arith.constant 0 : i32
    return %arg1, %c0_i32 : i32, i32
  }
  func.func @transform_3(%arg0: i32, %arg1: i32) -> (i32, i32) {
    %c0_i32 = arith.constant 0 : i32
    %c0_i32_0 = arith.constant 0 : i32
    return %arg0, %c0_i32 : i32, i32
  }
}

</mosaic_0001>

<llo_original>
// kernel: tpu_custom_call.1
$region0: #{tpu_custom_call.1}
  #allocation0 [shape = 'u32[]', space=smem, size = 0x4, offset = 0x4, fixed_abs, tag = 'smem constant byte address 0x4 - core index']
  #allocation1 [shape = 'u32[144,128]{1,0:T(1,128)}', space=vmem, size = 0x12000, scoped, tag = 'internal scratch']
  #allocation2 [shape = 'f32[16,128]{1,0:T(8,128)}', space=vmem, size = 0x2000, scoped, tag = 'scratch operand']
  %s0 = inlined_call_operand.hbm [shape: f32[16,128], index: 0, kind: input, shape index: {}]
  %s1 = inlined_call_operand.hbm [shape: f32[128,512], index: 1, kind: input, shape index: {}]
  %s2 = inlined_call_operand.hbm [shape: f32[256,128], index: 2, kind: input, shape index: {}]
  %s3 = inlined_call_operand.hbm [shape: f32[16,128], index: 3, kind: output, shape index: {}]
  %s4 = sld [smem:[#allocation0]]
  $region42: #{tpu_custom_call.1} parent=0
    _
  %s6 = ssub.s32 1, %s4
  %s7 = scalar_select 0, %s6, %s4
  $region1: #{tpu_custom_call.1} parent=0
    #allocation3 [shape = 'u8[8192]{0}', space=vmem, size = 0x2000, scoped, tag = 'input window, operand 0, single buffered']
    #allocation4 [shape = 's32[1]{0}', space=sflag, size = 0x4, scoped, tag = 'scoped memory for tpu_custom_call.1']
    #allocation5 [shape = 's32[1]{0}', space=sflag, size = 0x4, scoped, tag = 'scoped memory for tpu_custom_call.1']
    #allocation6 [shape = 'u8[262144]{0}', space=vmem, size = 0x40000, scoped, tag = 'input window, operand 1, single buffered']
    #allocation7 [shape = 's32[1]{0}', space=sflag, size = 0x4, scoped, tag = 'scoped memory for tpu_custom_call.1']
    #allocation8 [shape = 'u8[131072]{0}', space=vmem, size = 0x20000, scoped, tag = 'input window, operand 2, single buffered']
    #allocation9 [shape = 'u8[8192]{0}', space=vmem, size = 0x2000, scoped, tag = 'output window, operand 0, single buffered']
    %8 = vsyncpa [#allocation4], 0
    %9 = vsyncpa [#allocation7], 0
    %10 = vsyncpa [#allocation5], 0
    // Predicated region
    $region2: #{tpu_custom_call.1} parent=1 // pred_check
      _
    $region3: #{tpu_custom_call.1} parent=1 // pred_check_branch
      %12 = sbr.rel (0) target = $region5
    $region4: #{tpu_custom_call.1} parent=1 // pred_region
      %s14 = ssub.s32 256, 256
      %15 = vsyncadd [#allocation4], %s14
      %s16 = sshll.u32 [#allocation3], 4
      %s17 = int_to_ptr.vmem [resolvable:$true] %s16
      %22 = dma.hbm_to_vmem [thread:$0]  %s0, 256, %s17, [#allocation4], 128, 128, 8
    $region5: #{tpu_custom_call.1} parent=1 // pred_fallthru
      _
    // Predicated region
    $region6: #{tpu_custom_call.1} parent=1 // pred_check
      _
    $region7: #{tpu_custom_call.1} parent=1 // pred_check_branch
      %24 = sbr.rel (0) target = $region9
    $region8: #{tpu_custom_call.1} parent=1 // pred_region
      %s26 = ssub.s32 8192, 8192
      %27 = vsyncadd [#allocation7], %s26
      %s28 = sshll.u32 [#allocation6], 4
      %s29 = int_to_ptr.vmem [resolvable:$true] %s28
      %34 = dma.hbm_to_vmem [thread:$0]  %s1, 8192, %s29, [#allocation7], 512, 512, 32
    $region9: #{tpu_custom_call.1} parent=1 // pred_fallthru
      _
    // Predicated region
    $region10: #{tpu_custom_call.1} parent=1 // pred_check
      _
    $region11: #{tpu_custom_call.1} parent=1 // pred_check_branch
      %36 = sbr.rel (0) target = $region13
    $region12: #{tpu_custom_call.1} parent=1 // pred_region
      %s38 = ssub.s32 4096, 4096
      %39 = vsyncadd [#allocation7], %s38
      %s40 = sshll.u32 [#allocation8], 4
      %s41 = int_to_ptr.vmem [resolvable:$true] %s40
      %46 = dma.hbm_to_vmem [thread:$0]  %s2, 4096, %s41, [#allocation7], 128, 128, 8
    $region13: #{tpu_custom_call.1} parent=1 // pred_fallthru
      _
    // Predicated region
    $region14: #{tpu_custom_call.1} parent=1 // pred_check
      _
    $region15: #{tpu_custom_call.1} parent=1 // pred_check_branch
      %48 = sbr.rel (0) target = $region17
    $region16: #{tpu_custom_call.1} parent=1 // pred_region
      %49 = dma.done [#allocation4], 256
    $region17: #{tpu_custom_call.1} parent=1 // pred_fallthru
      _
    // Predicated region
    $region18: #{tpu_custom_call.1} parent=1 // pred_check
      _
    $region19: #{tpu_custom_call.1} parent=1 // pred_check_branch
      %51 = sbr.rel (0) target = $region21
    $region20: #{tpu_custom_call.1} parent=1 // pred_region
      %52 = dma.done [#allocation7], 8192
    $region21: #{tpu_custom_call.1} parent=1 // pred_fallthru
      _
    // Predicated region
    $region22: #{tpu_custom_call.1} parent=1 // pred_check
      _
    $region23: #{tpu_custom_call.1} parent=1 // pred_check_branch
      %54 = sbr.rel (0) target = $region25
    $region24: #{tpu_custom_call.1} parent=1 // pred_region
      %55 = dma.done [#allocation7], 4096
    $region25: #{tpu_custom_call.1} parent=1 // pred_fallthru
      _
    %p56 = scmp.eq.s32.totalorder 0, 0
    // Predicated region
    $region26: #{tpu_custom_call.1} parent=1 // pred_check
      %p57 = pneg %p56
    $region27: #{tpu_custom_call.1} parent=1 // pred_check_branch
      %59 = sbr.rel (%p57) target = $region29
    $region28: #{tpu_custom_call.1} parent=1 // pred_region
      %60 = vst [vmem:[#allocation2] sm:$0xff] 0.0
      %61 = vst [vmem:[#allocation2 + $0x8] sm:$0xff] 0.0
    $region29: #{tpu_custom_call.1} parent=1 // pred_fallthru
      _
    %v62 = vld [vmem:[#allocation3] sm:$0xff]
    %v63 = vld [vmem:[#allocation3 + $0x8] sm:$0xff]
    %v64 = vld [vmem:[#allocation6] sm:$0xff]
    %v65 = vld [vmem:[#allocation6 + $0x8] sm:$0xff]
    %v66 = vld [vmem:[#allocation6 + $0x10] sm:$0xff]
    %v67 = vld [vmem:[#allocation6 + $0x18] sm:$0xff]
    %v68 = vld [vmem:[#allocation6 + $0x20] sm:$0xff]
    %v69 = vld [vmem:[#allocation6 + $0x28] sm:$0xff]
    %v70 = vld [vmem:[#allocation6 + $0x30] sm:$0xff]
    %v71 = vld [vmem:[#allocation6 + $0x38] sm:$0xff]
    %v72 = vld [vmem:[#allocation6 + $0x40] sm:$0xff]
    %v73 = vld [vmem:[#allocation6 + $0x48] sm:$0xff]
    %v74 = vld [vmem:[#allocation6 + $0x50] sm:$0xff]
    %v75 = vld [vmem:[#allocation6 + $0x58] sm:$0xff]
    %v76 = vld [vmem:[#allocation6 + $0x60] sm:$0xff]
    %v77 = vld [vmem:[#allocation6 + $0x68] sm:$0xff]
    %v78 = vld [vmem:[#allocation6 + $0x70] sm:$0xff]
    %v79 = vld [vmem:[#allocation6 + $0x78] sm:$0xff]
    %v80 = vld [vmem:[#allocation6 + $0x80] sm:$0xff]
    %v81 = vld [vmem:[#allocation6 + $0x88] sm:$0xff]
    %v82 = vld [vmem:[#allocation6 + $0x90] sm:$0xff]
    %v83 = vld [vmem:[#allocation6 + $0x98] sm:$0xff]
    %v84 = vld [vmem:[#allocation6 + $0xa0] sm:$0xff]
    %v85 = vld [vmem:[#allocation6 + $0xa8] sm:$0xff]
    %v86 = vld [vmem:[#allocation6 + $0xb0] sm:$0xff]
    %v87 = vld [vmem:[#allocation6 + $0xb8] sm:$0xff]
    %v88 = vld [vmem:[#allocation6 + $0xc0] sm:$0xff]
    %v89 = vld [vmem:[#allocation6 + $0xc8] sm:$0xff]
    %v90 = vld [vmem:[#allocation6 + $0xd0] sm:$0xff]
    %v91 = vld [vmem:[#allocation6 + $0xd8] sm:$0xff]
    %v92 = vld [vmem:[#allocation6 + $0xe0] sm:$0xff]
    %v93 = vld [vmem:[#allocation6 + $0xe8] sm:$0xff]
    %v94 = vld [vmem:[#allocation6 + $0xf0] sm:$0xff]
    %v95 = vld [vmem:[#allocation6 + $0xf8] sm:$0xff]
    %v96 = vld [vmem:[#allocation6 + $0x100] sm:$0xff]
    %v97 = vld [vmem:[#allocation6 + $0x108] sm:$0xff]
    %v98 = vld [vmem:[#allocation6 + $0x110] sm:$0xff]
    %v99 = vld [vmem:[#allocation6 + $0x118] sm:$0xff]
    %v100 = vld [vmem:[#allocation6 + $0x120] sm:$0xff]
    %v101 = vld [vmem:[#allocation6 + $0x128] sm:$0xff]
    %v102 = vld [vmem:[#allocation6 + $0x130] sm:$0xff]
    %v103 = vld [vmem:[#allocation6 + $0x138] sm:$0xff]
    %v104 = vld [vmem:[#allocation6 + $0x140] sm:$0xff]
    %v105 = vld [vmem:[#allocation6 + $0x148] sm:$0xff]
    %v106 = vld [vmem:[#allocation6 + $0x150] sm:$0xff]
    %v107 = vld [vmem:[#allocation6 + $0x158] sm:$0xff]
    %v108 = vld [vmem:[#allocation6 + $0x160] sm:$0xff]
    %v109 = vld [vmem:[#allocation6 + $0x168] sm:$0xff]
    %v110 = vld [vmem:[#allocation6 + $0x170] sm:$0xff]
    %v111 = vld [vmem:[#allocation6 + $0x178] sm:$0xff]
    %v112 = vld [vmem:[#allocation6 + $0x180] sm:$0xff]
    %v113 = vld [vmem:[#allocation6 + $0x188] sm:$0xff]
    %v114 = vld [vmem:[#allocation6 + $0x190] sm:$0xff]
    %v115 = vld [vmem:[#allocation6 + $0x198] sm:$0xff]
    %v116 = vld [vmem:[#allocation6 + $0x1a0] sm:$0xff]
    %v117 = vld [vmem:[#allocation6 + $0x1a8] sm:$0xff]
    %v118 = vld [vmem:[#allocation6 + $0x1b0] sm:$0xff]
    %v119 = vld [vmem:[#allocation6 + $0x1b8] sm:$0xff]
    %v120 = vld [vmem:[#allocation6 + $0x1c0] sm:$0xff]
    %v121 = vld [vmem:[#allocation6 + $0x1c8] sm:$0xff]
    %v122 = vld [vmem:[#allocation6 + $0x1d0] sm:$0xff]
    %v123 = vld [vmem:[#allocation6 + $0x1d8] sm:$0xff]
    %v124 = vld [vmem:[#allocation6 + $0x1e0] sm:$0xff]
    %v125 = vld [vmem:[#allocation6 + $0x1e8] sm:$0xff]
    %v126 = vld [vmem:[#allocation6 + $0x1f0] sm:$0xff]
    %v127 = vld [vmem:[#allocation6 + $0x1f8] sm:$0xff]
    %128 = vmatprep.subr.mxu0 %v125
    %129 = vmatpush1.msra.mxu0 %v124
    %130 = vmatprep.subr.mxu0 %v121
    %131 = vmatpush1.msra.mxu0 %v120
    %132 = vmatprep.subr.mxu0 %v117
    %133 = vmatpush1.msra.mxu0 %v116
    %134 = vmatprep.subr.mxu0 %v113
    %135 = vmatpush1.msra.mxu0 %v112
    %136 = vmatprep.subr.mxu0 %v109
    %137 = vmatpush1.msra.mxu0 %v108
    %138 = vmatprep.subr.mxu0 %v105
    %139 = vmatpush1.msra.mxu0 %v104
    %140 = vmatprep.subr.mxu0 %v101
    %141 = vmatpush1.msra.mxu0 %v100
    %142 = vmatprep.subr.mxu0 %v97
    %143 = vmatpush1.msra.mxu0 %v96
    %144 = vmatprep.subr.mxu0 %v93
    %145 = vmatpush1.msra.mxu0 %v92
    %146 = vmatprep.subr.mxu0 %v89
    %147 = vmatpush1.msra.mxu0 %v88
    %148 = vmatprep.subr.mxu0 %v85
    %149 = vmatpush1.msra.mxu0 %v84
    %150 = vmatprep.subr.mxu0 %v81
    %151 = vmatpush1.msra.mxu0 %v80
    %152 = vmatprep.subr.mxu0 %v77
    %153 = vmatpush1.msra.mxu0 %v76
    %154 = vmatprep.subr.mxu0 %v73
    %155 = vmatpush1.msra.mxu0 %v72
    %156 = vmatprep.subr.mxu0 %v69
    %157 = vmatpush1.msra.mxu0 %v68
    %158 = vmatprep.subr.mxu0 %v65
    %159 = vmatpush1.msra.mxu0 %v64
    %160 = vmatprep.subr.mxu0 0.0
    %161 = vmatpush2.msra.mxu0 0.0
    %162 = vmatprep.subr.mxu0 0.0
    %163 = vmatpush2.msra.mxu0 0.0
    %164 = vmatprep.subr.mxu0 0.0
    %165 = vmatpush2.msra.mxu0 0.0
    %166 = vmatprep.subr.mxu0 0.0
    %167 = vmatpush2.msra.mxu0 0.0
    %168 = vmatprep.subr.mxu0 0.0
    %169 = vmatpush2.msra.mxu0 0.0
    %170 = vmatprep.subr.mxu0 0.0
    %171 = vmatpush2.msra.mxu0 0.0
    %172 = vmatprep.subr.mxu0 0.0
    %173 = vmatpush2.msra.mxu0 0.0
    %174 = vmatprep.subr.mxu0 0.0
    %175 = vmatpush2.msra.mxu0 0.0
    %176 = vmatprep.subr.mxu0 0.0
    %177 = vmatpush2.msra.mxu0 0.0
    %178 = vmatprep.subr.mxu0 0.0
    %179 = vmatpush2.msra.mxu0 0.0
    %180 = vmatprep.subr.mxu0 0.0
    %181 = vmatpush2.msra.mxu0 0.0
    %182 = vmatprep.subr.mxu0 0.0
    %183 = vmatpush2.msra.mxu0 0.0
    %184 = vmatprep.subr.mxu0 0.0
    %185 = vmatpush2.msra.mxu0 0.0
    %186 = vmatprep.subr.mxu0 0.0
    %187 = vmatpush2.msra.mxu0 0.0
    %188 = vmatprep.subr.mxu0 0.0
    %189 = vmatpush2.msra.mxu0 0.0
    %190 = vmatprep.subr.mxu0 0.0
    %191 = vmatpush2.msra.mxu0 0.0
    %192 = vmatprep.mubr.f32.mxu0 0.0
    %193 = vmatmul.mubr.f32.gmra.mxu0 %v62
    %v194 = vpop.f32.mrf.mxu0
    %v195 = vadd.f32 0.0, %v194
    %v196 = vpop.f32.mrf.mxu0
    %v197 = vadd.f32 0.0, %v196
    %198 = vmatprep.mubr.f32.mxu0 0.0
    %199 = vmatmul.mubr.f32.gmra.mxu0 %v63
    %v200 = vpop.f32.mrf.mxu0
    %v201 = vadd.f32 0.0, %v200
    %v202 = vpop.f32.mrf.mxu0
    %v203 = vadd.f32 0.0, %v202
    %204 = vdwg.mxu0
    %205 = vmatprep.subr.mxu0 %v127
    %206 = vmatpush1.msra.mxu0 %v126
    %207 = vmatprep.subr.mxu0 %v123
    %208 = vmatpush1.msra.mxu0 %v122
    %209 = vmatprep.subr.mxu0 %v119
    %210 = vmatpush1.msra.mxu0 %v118
    %211 = vmatprep.subr.mxu0 %v115
    %212 = vmatpush1.msra.mxu0 %v114
    %213 = vmatprep.subr.mxu0 %v111
    %214 = vmatpush1.msra.mxu0 %v110
    %215 = vmatprep.subr.mxu0 %v107
    %216 = vmatpush1.msra.mxu0 %v106
    %217 = vmatprep.subr.mxu0 %v103
    %218 = vmatpush1.msra.mxu0 %v102
    %219 = vmatprep.subr.mxu0 %v99
    %220 = vmatpush1.msra.mxu0 %v98
    %221 = vmatprep.subr.mxu0 %v95
    %222 = vmatpush1.msra.mxu0 %v94
    %223 = vmatprep.subr.mxu0 %v91
    %224 = vmatpush1.msra.mxu0 %v90
    %225 = vmatprep.subr.mxu0 %v87
    %226 = vmatpush1.msra.mxu0 %v86
    %227 = vmatprep.subr.mxu0 %v83
    %228 = vmatpush1.msra.mxu0 %v82
    %229 = vmatprep.subr.mxu0 %v79
    %230 = vmatpush1.msra.mxu0 %v78
    %231 = vmatprep.subr.mxu0 %v75
    %232 = vmatpush1.msra.mxu0 %v74
    %233 = vmatprep.subr.mxu0 %v71
    %234 = vmatpush1.msra.mxu0 %v70
    %235 = vmatprep.subr.mxu0 %v67
    %236 = vmatpush1.msra.mxu0 %v66
    %237 = vmatprep.subr.mxu0 0.0
    %238 = vmatpush2.msra.mxu0 0.0
    %239 = vmatprep.subr.mxu0 0.0
    %240 = vmatpush2.msra.mxu0 0.0
    %241 = vmatprep.subr.mxu0 0.0
    %242 = vmatpush2.msra.mxu0 0.0
    %243 = vmatprep.subr.mxu0 0.0
    %244 = vmatpush2.msra.mxu0 0.0
    %245 = vmatprep.subr.mxu0 0.0
    %246 = vmatpush2.msra.mxu0 0.0
    %247 = vmatprep.subr.mxu0 0.0
    %248 = vmatpush2.msra.mxu0 0.0
    %249 = vmatprep.subr.mxu0 0.0
    %250 = vmatpush2.msra.mxu0 0.0
    %251 = vmatprep.subr.mxu0 0.0
    %252 = vmatpush2.msra.mxu0 0.0
    %253 = vmatprep.subr.mxu0 0.0
    %254 = vmatpush2.msra.mxu0 0.0
    %255 = vmatprep.subr.mxu0 0.0
    %256 = vmatpush2.msra.mxu0 0.0
    %257 = vmatprep.subr.mxu0 0.0
    %258 = vmatpush2.msra.mxu0 0.0
    %259 = vmatprep.subr.mxu0 0.0
    %260 = vmatpush2.msra.mxu0 0.0
    %261 = vmatprep.subr.mxu0 0.0
    %262 = vmatpush2.msra.mxu0 0.0
    %263 = vmatprep.subr.mxu0 0.0
    %264 = vmatpush2.msra.mxu0 0.0
    %265 = vmatprep.subr.mxu0 0.0
    %266 = vmatpush2.msra.mxu0 0.0
    %267 = vmatprep.subr.mxu0 0.0
    %268 = vmatpush2.msra.mxu0 0.0
    %269 = vmatprep.mubr.f32.mxu0 0.0
    %270 = vmatmul.mubr.f32.gmra.mxu0 %v62
    %v271 = vpop.f32.mrf.mxu0
    %v272 = vadd.f32 0.0, %v271
    %v273 = vpop.f32.mrf.mxu0
    %v274 = vadd.f32 0.0, %v273
    %275 = vmatprep.mubr.f32.mxu0 0.0
    %276 = vmatmul.mubr.f32.gmra.mxu0 %v63
    %v277 = vpop.f32.mrf.mxu0
    %v278 = vadd.f32 0.0, %v277
    %v279 = vpop.f32.mrf.mxu0
    %v280 = vadd.f32 0.0, %v279
    %281 = vdwg.mxu0
    %v282 = vxor.u32 %v195, 2147483648
    %v283 = vxor.u32 %v197, 2147483648
    %v284 = vxor.u32 %v201, 2147483648
    %v285 = vxor.u32 %v203, 2147483648
    %v286 = vmul.f32 %v282, 1.442695
    %v287 = vpow.pop %v286
    %v288 = vmul.f32 %v283, 1.442695
    %v289 = vpow.pop %v288
    %v290 = vmul.f32 %v284, 1.442695
    %v291 = vpow.pop %v290
    %v292 = vmul.f32 %v285, 1.442695
    %v293 = vpow.pop %v292
    %v294 = vadd.f32 %v287, 1.0
    %v295 = vadd.f32 %v289, 1.0
    %v296 = vadd.f32 %v291, 1.0
    %v297 = vadd.f32 %v293, 1.0
    %v298 = vrcp.pop %v294
    %v299 = vmul.f32 1.0, %v298
    %v300 = vrcp.pop %v295
    %v301 = vmul.f32 1.0, %v300
    %v302 = vrcp.pop %v296
    %v303 = vmul.f32 1.0, %v302
    %v304 = vrcp.pop %v297
    %v305 = vmul.f32 1.0, %v304
    %v306 = vmul.f32 %v195, %v299
    %v307 = vmul.f32 %v197, %v301
    %v308 = vmul.f32 %v201, %v303
    %v309 = vmul.f32 %v203, %v305
    %v310 = vmul.f32 %v272, %v306
    %v311 = vmul.f32 %v274, %v307
    %v312 = vmul.f32 %v278, %v308
    %v313 = vmul.f32 %v280, %v309
    %v314 = vld [vmem:[#allocation2] sm:$0xff]
    %v315 = vld [vmem:[#allocation2 + $0x8] sm:$0xff]
    %v316 = vld [vmem:[#allocation8] sm:$0xff]
    %v317 = vld [vmem:[#allocation8 + $0x8] sm:$0xff]
    %v318 = vld [vmem:[#allocation8 + $0x10] sm:$0xff]
    %v319 = vld [vmem:[#allocation8 + $0x18] sm:$0xff]
    %v320 = vld [vmem:[#allocation8 + $0x20] sm:$0xff]
    %v321 = vld [vmem:[#allocation8 + $0x28] sm:$0xff]
    %v322 = vld [vmem:[#allocation8 + $0x30] sm:$0xff]
    %v323 = vld [vmem:[#allocation8 + $0x38] sm:$0xff]
    %v324 = vld [vmem:[#allocation8 + $0x40] sm:$0xff]
    %v325 = vld [vmem:[#allocation8 + $0x48] sm:$0xff]
    %v326 = vld [vmem:[#allocation8 + $0x50] sm:$0xff]
    %v327 = vld [vmem:[#allocation8 + $0x58] sm:$0xff]
    %v328 = vld [vmem:[#allocation8 + $0x60] sm:$0xff]
    %v329 = vld [vmem:[#allocation8 + $0x68] sm:$0xff]
    %v330 = vld [vmem:[#allocation8 + $0x70] sm:$0xff]
    %v331 = vld [vmem:[#allocation8 + $0x78] sm:$0xff]
    %v332 = vld [vmem:[#allocation8 + $0x80] sm:$0xff]
    %v333 = vld [vmem:[#allocation8 + $0x88] sm:$0xff]
    %v334 = vld [vmem:[#allocation8 + $0x90] sm:$0xff]
    %v335 = vld [vmem:[#allocation8 + $0x98] sm:$0xff]
    %v336 = vld [vmem:[#allocation8 + $0xa0] sm:$0xff]
    %v337 = vld [vmem:[#allocation8 + $0xa8] sm:$0xff]
    %v338 = vld [vmem:[#allocation8 + $0xb0] sm:$0xff]
    %v339 = vld [vmem:[#allocation8 + $0xb8] sm:$0xff]
    %v340 = vld [vmem:[#allocation8 + $0xc0] sm:$0xff]
    %v341 = vld [vmem:[#allocation8 + $0xc8] sm:$0xff]
    %v342 = vld [vmem:[#allocation8 + $0xd0] sm:$0xff]
    %v343 = vld [vmem:[#allocation8 + $0xd8] sm:$0xff]
    %v344 = vld [vmem:[#allocation8 + $0xe0] sm:$0xff]
    %v345 = vld [vmem:[#allocation8 + $0xe8] sm:$0xff]
    %v346 = vld [vmem:[#allocation8 + $0xf0] sm:$0xff]
    %v347 = vld [vmem:[#allocation8 + $0xf8] sm:$0xff]
    %348 = vmatprep.subr.mxu0 0.0
    %349 = vmatpush1.msra.mxu0 %v331
    %350 = vmatprep.subr.mxu0 0.0
    %351 = vmatpush1.msra.mxu0 %v330
    %352 = vmatprep.subr.mxu0 0.0
    %353 = vmatpush1.msra.mxu0 %v329
    %354 = vmatprep.subr.mxu0 0.0
    %355 = vmatpush1.msra.mxu0 %v328
    %356 = vmatprep.subr.mxu0 0.0
    %357 = vmatpush1.msra.mxu0 %v327
    %358 = vmatprep.subr.mxu0 0.0
    %359 = vmatpush1.msra.mxu0 %v326
    %360 = vmatprep.subr.mxu0 0.0
    %361 = vmatpush1.msra.mxu0 %v325
    %362 = vmatprep.subr.mxu0 0.0
    %363 = vmatpush1.msra.mxu0 %v324
    %364 = vmatprep.subr.mxu0 0.0
    %365 = vmatpush1.msra.mxu0 %v323
    %366 = vmatprep.subr.mxu0 0.0
    %367 = vmatpush1.msra.mxu0 %v322
    %368 = vmatprep.subr.mxu0 0.0
    %369 = vmatpush1.msra.mxu0 %v321
    %370 = vmatprep.subr.mxu0 0.0
    %371 = vmatpush1.msra.mxu0 %v320
    %372 = vmatprep.subr.mxu0 0.0
    %373 = vmatpush1.msra.mxu0 %v319
    %374 = vmatprep.subr.mxu0 0.0
    %375 = vmatpush1.msra.mxu0 %v318
    %376 = vmatprep.subr.mxu0 0.0
    %377 = vmatpush1.msra.mxu0 %v317
    %378 = vmatprep.subr.mxu0 0.0
    %379 = vmatpush1.msra.mxu0 %v316
    %380 = vmatprep.subr.mxu0 0.0
    %381 = vmatpush2.msra.mxu0 %v347
    %382 = vmatprep.subr.mxu0 0.0
    %383 = vmatpush2.msra.mxu0 %v346
    %384 = vmatprep.subr.mxu0 0.0
    %385 = vmatpush2.msra.mxu0 %v345
    %386 = vmatprep.subr.mxu0 0.0
    %387 = vmatpush2.msra.mxu0 %v344
    %388 = vmatprep.subr.mxu0 0.0
    %389 = vmatpush2.msra.mxu0 %v343
    %390 = vmatprep.subr.mxu0 0.0
    %391 = vmatpush2.msra.mxu0 %v342
    %392 = vmatprep.subr.mxu0 0.0
    %393 = vmatpush2.msra.mxu0 %v341
    %394 = vmatprep.subr.mxu0 0.0
    %395 = vmatpush2.msra.mxu0 %v340
    %396 = vmatprep.subr.mxu0 0.0
    %397 = vmatpush2.msra.mxu0 %v339
    %398 = vmatprep.subr.mxu0 0.0
    %399 = vmatpush2.msra.mxu0 %v338
    %400 = vmatprep.subr.mxu0 0.0
    %401 = vmatpush2.msra.mxu0 %v337
    %402 = vmatprep.subr.mxu0 0.0
    %403 = vmatpush2.msra.mxu0 %v336
    %404 = vmatprep.subr.mxu0 0.0
    %405 = vmatpush2.msra.mxu0 %v335
    %406 = vmatprep.subr.mxu0 0.0
    %407 = vmatpush2.msra.mxu0 %v334
    %408 = vmatprep.subr.mxu0 0.0
    %409 = vmatpush2.msra.mxu0 %v333
    %410 = vmatprep.subr.mxu0 0.0
    %411 = vmatpush2.msra.mxu0 %v332
    %412 = vmatprep.mubr.f32.mxu0 %v311
    %413 = vmatmul.mubr.f32.gmra.mxu0 %v310
    %v414 = vpop.f32.mrf.mxu0
    %v415 = vadd.f32 0.0, %v414
    %v416 = vpop.f32.mrf.mxu0
    %417 = vmatprep.mubr.f32.mxu0 %v313
    %418 = vmatmul.mubr.f32.gmra.mxu0 %v312
    %v419 = vpop.f32.mrf.mxu0
    %v420 = vadd.f32 0.0, %v419
    %v421 = vpop.f32.mrf.mxu0
    %422 = vdwg.mxu0
    %v423 = vadd.f32 %v314, %v415
    %v424 = vadd.f32 %v315, %v420
    %425 = vst [vmem:[#allocation2] sm:$0xff] %v423
    %426 = vst [vmem:[#allocation2 + $0x8] sm:$0xff] %v424
    // Predicated region
    $region30: #{tpu_custom_call.1} parent=1 // pred_check
      %p427 = pneg %p56
    $region31: #{tpu_custom_call.1} parent=1 // pred_check_branch
      %429 = sbr.rel (%p427) target = $region33
    $region32: #{tpu_custom_call.1} parent=1 // pred_region
      %v430 = vld [vmem:[#allocation2] sm:$0xff]
      %v431 = vld [vmem:[#allocation2 + $0x8] sm:$0xff]
      %432 = vst [vmem:[#allocation9] sm:$0xff] %v430
      %433 = vst [vmem:[#allocation9 + $0x8] sm:$0xff] %v431
    $region33: #{tpu_custom_call.1} parent=1 // pred_fallthru
      _
    // Predicated region
    $region34: #{tpu_custom_call.1} parent=1 // pred_check
      _
    $region35: #{tpu_custom_call.1} parent=1 // pred_check_branch
      %435 = sbr.rel (0) target = $region37
    $region36: #{tpu_custom_call.1} parent=1 // pred_region
      %s437 = ssub.s32 256, 256
      %438 = vsyncadd [#allocation5], %s437
      %s439 = sshll.u32 [#allocation9], 4
      %s440 = int_to_ptr.vmem [resolvable:$true] %s439
      %445 = dma.vmem_to_hbm [thread:$0]  %s440, 256, %s3, [#allocation5], 128, 128, 8
    $region37: #{tpu_custom_call.1} parent=1 // pred_fallthru
      _
    // Predicated region
    $region38: #{tpu_custom_call.1} parent=1 // pred_check
      _
    $region39: #{tpu_custom_call.1} parent=1 // pred_check_branch
      %447 = sbr.rel (0) target = $region41
    $region40: #{tpu_custom_call.1} parent=1 // pred_region
      %448 = dma.done [#allocation5], 256
    $region41: #{tpu_custom_call.1} parent=1 // pred_fallthru
      _
    %449 = vsyncpa [#allocation4], 1
    %450 = vsyncpa [#allocation7], 1
    %451 = vsyncpa [#allocation5], 1

</llo_original>
